<compile_context>
chip_gen: v5e
topology: v5e:2x2
jax: 0.10.0
libtpu: 0.0.40
codegen_flags: <defaults>
</compile_context>

<pallas_src>
import jax
import jax.numpy as jnp
import numpy as np
from jax import lax
from jax.experimental import pallas as pl
from jax.experimental.pallas import tpu as pltpu


# ----------------------------------------------------------------------------
# Pallas kernel: single grid step.  One hoisted input-projection GEMM, then the
# full time recurrence as a statically unrolled loop with h/c carried in vregs.
# ----------------------------------------------------------------------------
def lstm_kernel(x_ref, wih_ref, whh_ref, b_ref, hc_ref):
    B = hc_ref.shape[0]
    H = hc_ref.shape[1] // 2
    TB = x_ref.shape[0]
    T = TB // B                       # static

    # (1) Input projection for ALL timesteps in one MXU GEMM (bf16 operands,
    #     f32 accumulate), hoisted out of the sequential recurrence.  Kept as a
    #     value (no VMEM scratch round trip: only a few vregs at this size).
    gx = jnp.dot(x_ref[...], wih_ref[...],
                 preferred_element_type=jnp.float32) + b_ref[...]   # (T*B, 4H) f32

    whh = whh_ref[...]                                              # (H, 4H) bf16

    h = jnp.zeros((B, H), jnp.float32)                              # h0 = c0 = 0
    c = jnp.zeros((B, H), jnp.float32)

    # Fully unrolled recurrence (T is small and static); static slices into gx.
    for t in range(T):
        gates = gx[t * B:(t + 1) * B, :] + jnp.dot(
            h.astype(jnp.bfloat16), whh,
            preferred_element_type=jnp.float32)                     # (B, 4H) f32

        # One full-vreg sigmoid pass + one tanh on the cell-gate slice
        # (2 EUP pushes per step instead of where-blend's mask/select + 2 passes).
        sig = jax.nn.sigmoid(gates)
        g_g = jnp.tanh(gates[:, 2 * H:3 * H])

        i_g = sig[:, 0 * H:1 * H]
        f_g = sig[:, 1 * H:2 * H]
        o_g = sig[:, 3 * H:4 * H]

        c = f_g * c + i_g * g_g
        h = o_g * jnp.tanh(c)

    # Single lane-denser store: [h | c] packed as (B, 2H), split in the wrapper.
    hc_ref[...] = jnp.concatenate([h, c], axis=1).astype(hc_ref.dtype)


def lstm_encoder_pallas(token_ids, emb_table, w_ih, w_hh, b_ih, b_hh):
    """token_ids: (B, T) int32.  Returns (hn, cn), each (1, B, H)."""
    B, T = token_ids.shape
    D = emb_table.shape[1]
    H = w_hh.shape[1]
    G = 4 * H

    # Embedding lookup directly in TIME-MAJOR order: (T, B, D).  Avoids a full
    # HBM->HBM transpose pass over the activations; the reshape below is free.
    # padding_idx row is zero in emb_table, matching nn.Embedding(padding_idx=...)
    # (zero stays exactly zero under the bf16 cast).
    x_tm = jnp.take(emb_table, token_ids.T, axis=0)                 # (T, B, D)
    x2d = x_tm.reshape(T * B, D).astype(jnp.bfloat16)               # (T*B, D)

    # Pre-transpose weights so the kernel does row-major matmuls; bf16 operands.
    wih_t = jnp.transpose(w_ih).astype(jnp.bfloat16)                # (D, 4H)
    whh_t = jnp.transpose(w_hh).astype(jnp.bfloat16)                # (H, 4H)
    bias = (b_ih + b_hh).reshape(1, G).astype(jnp.float32)          # (1, 4H)

    # VMEM budget from actual buffer sizes (x2 for double-buffering) + margin,
    # floored well under every chip's scoped limit.
    resident_bytes = (x2d.size * 2 + wih_t.size * 2 + whh_t.size * 2
                      + bias.size * 4 + B * 2 * H * 4)
    vmem_limit = max(2 * resident_bytes + (1 << 20), 8 << 20)

    hc = pl.pallas_call(
        lstm_kernel,
        out_shape=jax.ShapeDtypeStruct((B, 2 * H), jnp.float32),
        grid=(1,),                                       # single resident grid step
        in_specs=[
            pl.BlockSpec((T * B, D), lambda i: (0, 0)),  # embedded seq (bf16)
            pl.BlockSpec((D, G), lambda i: (0, 0)),      # W_ih^T (resident)
            pl.BlockSpec((H, G), lambda i: (0, 0)),      # W_hh^T (resident)
            pl.BlockSpec((1, G), lambda i: (0, 0)),      # combined bias
        ],
        out_specs=pl.BlockSpec((B, 2 * H), lambda i: (0, 0)),   # packed [h | c]
        compiler_params=pltpu.CompilerParams(
            dimension_semantics=("arbitrary",),          # recurrence is sequential
            vmem_limit_bytes=int(vmem_limit),
        ),
    )(x2d, wih_t, whh_t, bias)

    hn = hc[:, :H]
    cn = hc[:, H:]
    return hn[None], cn[None]                            # (1, B, H) each


# ----------------------------------------------------------------------------
# Pure-JAX f32 reference (lax.scan) for correctness checking.
# ----------------------------------------------------------------------------
def lstm_encoder_ref(token_ids, emb_table, w_ih, w_hh, b_ih, b_hh):
    B, T = token_ids.shape
    H = w_hh.shape[1]
    x = jnp.take(emb_table, token_ids, axis=0).astype(jnp.float32)     # (B, T, D)

    def step(carry, x_t):
        h, c = carry
        gates = x_t @ w_ih.T + h @ w_hh.T + b_ih + b_hh
        i_g = jax.nn.sigmoid(gates[:, 0 * H:1 * H])
        f_g = jax.nn.sigmoid(gates[:, 1 * H:2 * H])
        g_g = jnp.tanh(gates[:, 2 * H:3 * H])
        o_g = jax.nn.sigmoid(gates[:, 3 * H:4 * H])
        c_new = f_g * c + i_g * g_g
        h_new = o_g * jnp.tanh(c_new)
        return (h_new, c_new), None

    h0 = jnp.zeros((B, H), jnp.float32)
    c0 = jnp.zeros((B, H), jnp.float32)
    (hn, cn), _ = lax.scan(step, (h0, c0), jnp.transpose(x, (1, 0, 2)))
    return hn[None], cn[None]


if __name__ == "__main__":
    # Module hyperparameters (small, deterministic)
    input_dim = 32      # D
    hidden_dim = 32     # H
    vocab_size = 50
    pad_token_id = 0
    B, T = 8, 8

    key = jax.random.PRNGKey(0)
    k_emb, k_wih, k_whh, k_bih, k_bhh, k_tok = jax.random.split(key, 6)

    # nn.Embedding: (vocab, D), padding_idx row zeroed.
    emb_table = jax.random.normal(k_emb, (vocab_size, input_dim), jnp.float32)
    emb_table = emb_table.at[pad_token_id].set(0.0)

    # nn.LSTM params, uniform(-1/sqrt(H), 1/sqrt(H)), gate order i,f,g,o.
    bound = 1.0 / np.sqrt(hidden_dim)
    w_ih = jax.random.uniform(k_wih, (4 * hidden_dim, input_dim), jnp.float32,
                              -bound, bound)
    w_hh = jax.random.uniform(k_whh, (4 * hidden_dim, hidden_dim), jnp.float32,
                              -bound, bound)
    b_ih = jax.random.uniform(k_bih, (4 * hidden_dim,), jnp.float32, -bound, bound)
    b_hh = jax.random.uniform(k_bhh, (4 * hidden_dim,), jnp.float32, -bound, bound)

    # Input token ids (B, T), includes some pad tokens.
    token_ids = jax.random.randint(k_tok, (B, T), 0, vocab_size, jnp.int32)

    hn, cn = lstm_encoder_pallas(token_ids, emb_table, w_ih, w_hh, b_ih, b_hh)
    jax.block_until_ready((hn, cn))

    hn_ref, cn_ref = lstm_encoder_ref(token_ids, emb_table, w_ih, w_hh, b_ih, b_hh)
    # Tolerances loosened vs. the f32 reference because MXU operands are bf16
    # (f32 accumulate); hidden/cell values are O(1), so 3e-2 is comfortable.
    np.testing.assert_allclose(np.asarray(hn), np.asarray(hn_ref), rtol=3e-2, atol=3e-2)
    np.testing.assert_allclose(np.asarray(cn), np.asarray(cn_ref), rtol=3e-2, atol=3e-2)

    assert hn.shape == (1, B, hidden_dim) and cn.shape == (1, B, hidden_dim)
    print("KERNEL_OK")
</pallas_src>

<mosaic_0001>
module attributes {stable_mosaic.version = 11 : i64} {
  func.func @lstm_kernel(%arg0: i32, %arg1: memref<64x32xbf16, #tpu.memory_space<vmem>>, %arg2: memref<32x128xbf16, #tpu.memory_space<vmem>>, %arg3: memref<32x128xbf16, #tpu.memory_space<vmem>>, %arg4: memref<1x128xf32, #tpu.memory_space<vmem>>, %arg5: memref<8x64xf32, #tpu.memory_space<vmem>>) attributes {dimension_semantics = [#tpu.dimension_semantics<arbitrary>], iteration_bounds = array<i64: 1>, scalar_prefetch = 0 : i64, scratch_operands = 0 : i64, tpu.core_type = #tpu.core_type<tc>, window_params = [{pipeline_mode = #tpu.pipeline_mode<synchronous>, transform_indices = @transform_0, window_bounds = array<i64: 64, 32>}, {pipeline_mode = #tpu.pipeline_mode<synchronous>, transform_indices = @transform_1, window_bounds = array<i64: 32, 128>}, {pipeline_mode = #tpu.pipeline_mode<synchronous>, transform_indices = @transform_2, window_bounds = array<i64: 32, 128>}, {pipeline_mode = #tpu.pipeline_mode<synchronous>, transform_indices = @transform_3, window_bounds = array<i64: 1, 128>}, {pipeline_mode = #tpu.pipeline_mode<synchronous>, transform_indices = @transform_4, window_bounds = array<i64: 8, 64>}]} {
    %c0 = arith.constant 0 : index
    %c0_0 = arith.constant 0 : index
    %0 = vector.load %arg1[%c0, %c0_0] : memref<64x32xbf16, #tpu.memory_space<vmem>>, vector<64x32xbf16>
    %c0_1 = arith.constant 0 : index
    %c0_2 = arith.constant 0 : index
    %1 = vector.load %arg2[%c0_1, %c0_2] : memref<32x128xbf16, #tpu.memory_space<vmem>>, vector<32x128xbf16>
    %cst = arith.constant dense<0.000000e+00> : vector<64x128xf32>
    %2 = tpu.matmul %0, %1, %cst {dimension_numbers = #tpu.dot_dimension_numbers<[1], [0], [0], [1], [0, 0, 1, 1], [], []>} : vector<64x32xbf16>, vector<32x128xbf16>, vector<64x128xf32> -> vector<64x128xf32>
    %c0_3 = arith.constant 0 : index
    %c0_4 = arith.constant 0 : index
    %3 = vector.load %arg4[%c0_3, %c0_4] : memref<1x128xf32, #tpu.memory_space<vmem>>, vector<1x128xf32>
    %4 = vector.broadcast %3 : vector<1x128xf32> to vector<64x128xf32>
    %5 = arith.addf %2, %4 : vector<64x128xf32>
    %c0_5 = arith.constant 0 : index
    %c0_6 = arith.constant 0 : index
    %6 = vector.load %arg3[%c0_5, %c0_6] : memref<32x128xbf16, #tpu.memory_space<vmem>>, vector<32x128xbf16>
    %cst_7 = arith.constant 0.000000e+00 : f32
    %7 = vector.broadcast %cst_7 : f32 to vector<8x32xf32>
    %cst_8 = arith.constant 0.000000e+00 : f32
    %8 = vector.broadcast %cst_8 : f32 to vector<8x32xf32>
    %9 = vector.extract_strided_slice %5 {offsets = [0, 0], sizes = [8, 128], strides = [1, 1]} : vector<64x128xf32> to vector<8x128xf32>
    %10 = arith.truncf %7 : vector<8x32xf32> to vector<8x32xbf16>
    %cst_9 = arith.constant dense<0.000000e+00> : vector<8x128xf32>
    %11 = tpu.matmul %10, %6, %cst_9 {dimension_numbers = #tpu.dot_dimension_numbers<[1], [0], [0], [1], [0, 0, 1, 1], [], []>} : vector<8x32xbf16>, vector<32x128xbf16>, vector<8x128xf32> -> vector<8x128xf32>
    %12 = arith.addf %9, %11 : vector<8x128xf32>
    %13 = arith.negf %12 : vector<8x128xf32>
    %14 = math.exp %13 : vector<8x128xf32>
    %cst_10 = arith.constant 1.000000e+00 : f32
    %15 = vector.broadcast %cst_10 : f32 to vector<8x128xf32>
    %16 = arith.addf %15, %14 : vector<8x128xf32>
    %17 = arith.divf %15, %16 : vector<8x128xf32>
    %18 = vector.extract_strided_slice %12 {offsets = [0, 64], sizes = [8, 32], strides = [1, 1]} : vector<8x128xf32> to vector<8x32xf32>
    %19 = math.tanh %18 : vector<8x32xf32>
    %20 = vector.extract_strided_slice %17 {offsets = [0, 0], sizes = [8, 32], strides = [1, 1]} : vector<8x128xf32> to vector<8x32xf32>
    %21 = vector.extract_strided_slice %17 {offsets = [0, 32], sizes = [8, 32], strides = [1, 1]} : vector<8x128xf32> to vector<8x32xf32>
    %22 = vector.extract_strided_slice %17 {offsets = [0, 96], sizes = [8, 32], strides = [1, 1]} : vector<8x128xf32> to vector<8x32xf32>
    %23 = arith.mulf %21, %8 : vector<8x32xf32>
    %24 = arith.mulf %20, %19 : vector<8x32xf32>
    %25 = arith.addf %23, %24 : vector<8x32xf32>
    %26 = math.tanh %25 : vector<8x32xf32>
    %27 = arith.mulf %22, %26 : vector<8x32xf32>
    %28 = vector.extract_strided_slice %5 {offsets = [8, 0], sizes = [8, 128], strides = [1, 1]} : vector<64x128xf32> to vector<8x128xf32>
    %29 = arith.truncf %27 : vector<8x32xf32> to vector<8x32xbf16>
    %cst_11 = arith.constant dense<0.000000e+00> : vector<8x128xf32>
    %30 = tpu.matmul %29, %6, %cst_11 {dimension_numbers = #tpu.dot_dimension_numbers<[1], [0], [0], [1], [0, 0, 1, 1], [], []>} : vector<8x32xbf16>, vector<32x128xbf16>, vector<8x128xf32> -> vector<8x128xf32>
    %31 = arith.addf %28, %30 : vector<8x128xf32>
    %32 = arith.negf %31 : vector<8x128xf32>
    %33 = math.exp %32 : vector<8x128xf32>
    %cst_12 = arith.constant 1.000000e+00 : f32
    %34 = vector.broadcast %cst_12 : f32 to vector<8x128xf32>
    %35 = arith.addf %34, %33 : vector<8x128xf32>
    %36 = arith.divf %34, %35 : vector<8x128xf32>
    %37 = vector.extract_strided_slice %31 {offsets = [0, 64], sizes = [8, 32], strides = [1, 1]} : vector<8x128xf32> to vector<8x32xf32>
    %38 = math.tanh %37 : vector<8x32xf32>
    %39 = vector.extract_strided_slice %36 {offsets = [0, 0], sizes = [8, 32], strides = [1, 1]} : vector<8x128xf32> to vector<8x32xf32>
    %40 = vector.extract_strided_slice %36 {offsets = [0, 32], sizes = [8, 32], strides = [1, 1]} : vector<8x128xf32> to vector<8x32xf32>
    %41 = vector.extract_strided_slice %36 {offsets = [0, 96], sizes = [8, 32], strides = [1, 1]} : vector<8x128xf32> to vector<8x32xf32>
    %42 = arith.mulf %40, %25 : vector<8x32xf32>
    %43 = arith.mulf %39, %38 : vector<8x32xf32>
    %44 = arith.addf %42, %43 : vector<8x32xf32>
    %45 = math.tanh %44 : vector<8x32xf32>
    %46 = arith.mulf %41, %45 : vector<8x32xf32>
    %47 = vector.extract_strided_slice %5 {offsets = [16, 0], sizes = [8, 128], strides = [1, 1]} : vector<64x128xf32> to vector<8x128xf32>
    %48 = arith.truncf %46 : vector<8x32xf32> to vector<8x32xbf16>
    %cst_13 = arith.constant dense<0.000000e+00> : vector<8x128xf32>
    %49 = tpu.matmul %48, %6, %cst_13 {dimension_numbers = #tpu.dot_dimension_numbers<[1], [0], [0], [1], [0, 0, 1, 1], [], []>} : vector<8x32xbf16>, vector<32x128xbf16>, vector<8x128xf32> -> vector<8x128xf32>
    %50 = arith.addf %47, %49 : vector<8x128xf32>
    %51 = arith.negf %50 : vector<8x128xf32>
    %52 = math.exp %51 : vector<8x128xf32>
    %cst_14 = arith.constant 1.000000e+00 : f32
    %53 = vector.broadcast %cst_14 : f32 to vector<8x128xf32>
    %54 = arith.addf %53, %52 : vector<8x128xf32>
    %55 = arith.divf %53, %54 : vector<8x128xf32>
    %56 = vector.extract_strided_slice %50 {offsets = [0, 64], sizes = [8, 32], strides = [1, 1]} : vector<8x128xf32> to vector<8x32xf32>
    %57 = math.tanh %56 : vector<8x32xf32>
    %58 = vector.extract_strided_slice %55 {offsets = [0, 0], sizes = [8, 32], strides = [1, 1]} : vector<8x128xf32> to vector<8x32xf32>
    %59 = vector.extract_strided_slice %55 {offsets = [0, 32], sizes = [8, 32], strides = [1, 1]} : vector<8x128xf32> to vector<8x32xf32>
    %60 = vector.extract_strided_slice %55 {offsets = [0, 96], sizes = [8, 32], strides = [1, 1]} : vector<8x128xf32> to vector<8x32xf32>
    %61 = arith.mulf %59, %44 : vector<8x32xf32>
    %62 = arith.mulf %58, %57 : vector<8x32xf32>
    %63 = arith.addf %61, %62 : vector<8x32xf32>
    %64 = math.tanh %63 : vector<8x32xf32>
    %65 = arith.mulf %60, %64 : vector<8x32xf32>
    %66 = vector.extract_strided_slice %5 {offsets = [24, 0], sizes = [8, 128], strides = [1, 1]} : vector<64x128xf32> to vector<8x128xf32>
    %67 = arith.truncf %65 : vector<8x32xf32> to vector<8x32xbf16>
    %cst_15 = arith.constant dense<0.000000e+00> : vector<8x128xf32>
    %68 = tpu.matmul %67, %6, %cst_15 {dimension_numbers = #tpu.dot_dimension_numbers<[1], [0], [0], [1], [0, 0, 1, 1], [], []>} : vector<8x32xbf16>, vector<32x128xbf16>, vector<8x128xf32> -> vector<8x128xf32>
    %69 = arith.addf %66, %68 : vector<8x128xf32>
    %70 = arith.negf %69 : vector<8x128xf32>
    %71 = math.exp %70 : vector<8x128xf32>
    %cst_16 = arith.constant 1.000000e+00 : f32
    %72 = vector.broadcast %cst_16 : f32 to vector<8x128xf32>
    %73 = arith.addf %72, %71 : vector<8x128xf32>
    %74 = arith.divf %72, %73 : vector<8x128xf32>
    %75 = vector.extract_strided_slice %69 {offsets = [0, 64], sizes = [8, 32], strides = [1, 1]} : vector<8x128xf32> to vector<8x32xf32>
    %76 = math.tanh %75 : vector<8x32xf32>
    %77 = vector.extract_strided_slice %74 {offsets = [0, 0], sizes = [8, 32], strides = [1, 1]} : vector<8x128xf32> to vector<8x32xf32>
    %78 = vector.extract_strided_slice %74 {offsets = [0, 32], sizes = [8, 32], strides = [1, 1]} : vector<8x128xf32> to vector<8x32xf32>
    %79 = vector.extract_strided_slice %74 {offsets = [0, 96], sizes = [8, 32], strides = [1, 1]} : vector<8x128xf32> to vector<8x32xf32>
    %80 = arith.mulf %78, %63 : vector<8x32xf32>
    %81 = arith.mulf %77, %76 : vector<8x32xf32>
    %82 = arith.addf %80, %81 : vector<8x32xf32>
    %83 = math.tanh %82 : vector<8x32xf32>
    %84 = arith.mulf %79, %83 : vector<8x32xf32>
    %85 = vector.extract_strided_slice %5 {offsets = [32, 0], sizes = [8, 128], strides = [1, 1]} : vector<64x128xf32> to vector<8x128xf32>
    %86 = arith.truncf %84 : vector<8x32xf32> to vector<8x32xbf16>
    %cst_17 = arith.constant dense<0.000000e+00> : vector<8x128xf32>
    %87 = tpu.matmul %86, %6, %cst_17 {dimension_numbers = #tpu.dot_dimension_numbers<[1], [0], [0], [1], [0, 0, 1, 1], [], []>} : vector<8x32xbf16>, vector<32x128xbf16>, vector<8x128xf32> -> vector<8x128xf32>
    %88 = arith.addf %85, %87 : vector<8x128xf32>
    %89 = arith.negf %88 : vector<8x128xf32>
    %90 = math.exp %89 : vector<8x128xf32>
    %cst_18 = arith.constant 1.000000e+00 : f32
    %91 = vector.broadcast %cst_18 : f32 to vector<8x128xf32>
    %92 = arith.addf %91, %90 : vector<8x128xf32>
    %93 = arith.divf %91, %92 : vector<8x128xf32>
    %94 = vector.extract_strided_slice %88 {offsets = [0, 64], sizes = [8, 32], strides = [1, 1]} : vector<8x128xf32> to vector<8x32xf32>
    %95 = math.tanh %94 : vector<8x32xf32>
    %96 = vector.extract_strided_slice %93 {offsets = [0, 0], sizes = [8, 32], strides = [1, 1]} : vector<8x128xf32> to vector<8x32xf32>
    %97 = vector.extract_strided_slice %93 {offsets = [0, 32], sizes = [8, 32], strides = [1, 1]} : vector<8x128xf32> to vector<8x32xf32>
    %98 = vector.extract_strided_slice %93 {offsets = [0, 96], sizes = [8, 32], strides = [1, 1]} : vector<8x128xf32> to vector<8x32xf32>
    %99 = arith.mulf %97, %82 : vector<8x32xf32>
    %100 = arith.mulf %96, %95 : vector<8x32xf32>
    %101 = arith.addf %99, %100 : vector<8x32xf32>
    %102 = math.tanh %101 : vector<8x32xf32>
    %103 = arith.mulf %98, %102 : vector<8x32xf32>
    %104 = vector.extract_strided_slice %5 {offsets = [40, 0], sizes = [8, 128], strides = [1, 1]} : vector<64x128xf32> to vector<8x128xf32>
    %105 = arith.truncf %103 : vector<8x32xf32> to vector<8x32xbf16>
    %cst_19 = arith.constant dense<0.000000e+00> : vector<8x128xf32>
    %106 = tpu.matmul %105, %6, %cst_19 {dimension_numbers = #tpu.dot_dimension_numbers<[1], [0], [0], [1], [0, 0, 1, 1], [], []>} : vector<8x32xbf16>, vector<32x128xbf16>, vector<8x128xf32> -> vector<8x128xf32>
    %107 = arith.addf %104, %106 : vector<8x128xf32>
    %108 = arith.negf %107 : vector<8x128xf32>
    %109 = math.exp %108 : vector<8x128xf32>
    %cst_20 = arith.constant 1.000000e+00 : f32
    %110 = vector.broadcast %cst_20 : f32 to vector<8x128xf32>
    %111 = arith.addf %110, %109 : vector<8x128xf32>
    %112 = arith.divf %110, %111 : vector<8x128xf32>
    %113 = vector.extract_strided_slice %107 {offsets = [0, 64], sizes = [8, 32], strides = [1, 1]} : vector<8x128xf32> to vector<8x32xf32>
    %114 = math.tanh %113 : vector<8x32xf32>
    %115 = vector.extract_strided_slice %112 {offsets = [0, 0], sizes = [8, 32], strides = [1, 1]} : vector<8x128xf32> to vector<8x32xf32>
    %116 = vector.extract_strided_slice %112 {offsets = [0, 32], sizes = [8, 32], strides = [1, 1]} : vector<8x128xf32> to vector<8x32xf32>
    %117 = vector.extract_strided_slice %112 {offsets = [0, 96], sizes = [8, 32], strides = [1, 1]} : vector<8x128xf32> to vector<8x32xf32>
    %118 = arith.mulf %116, %101 : vector<8x32xf32>
    %119 = arith.mulf %115, %114 : vector<8x32xf32>
    %120 = arith.addf %118, %119 : vector<8x32xf32>
    %121 = math.tanh %120 : vector<8x32xf32>
    %122 = arith.mulf %117, %121 : vector<8x32xf32>
    %123 = vector.extract_strided_slice %5 {offsets = [48, 0], sizes = [8, 128], strides = [1, 1]} : vector<64x128xf32> to vector<8x128xf32>
    %124 = arith.truncf %122 : vector<8x32xf32> to vector<8x32xbf16>
    %cst_21 = arith.constant dense<0.000000e+00> : vector<8x128xf32>
    %125 = tpu.matmul %124, %6, %cst_21 {dimension_numbers = #tpu.dot_dimension_numbers<[1], [0], [0], [1], [0, 0, 1, 1], [], []>} : vector<8x32xbf16>, vector<32x128xbf16>, vector<8x128xf32> -> vector<8x128xf32>
    %126 = arith.addf %123, %125 : vector<8x128xf32>
    %127 = arith.negf %126 : vector<8x128xf32>
    %128 = math.exp %127 : vector<8x128xf32>
    %cst_22 = arith.constant 1.000000e+00 : f32
    %129 = vector.broadcast %cst_22 : f32 to vector<8x128xf32>
    %130 = arith.addf %129, %128 : vector<8x128xf32>
    %131 = arith.divf %129, %130 : vector<8x128xf32>
    %132 = vector.extract_strided_slice %126 {offsets = [0, 64], sizes = [8, 32], strides = [1, 1]} : vector<8x128xf32> to vector<8x32xf32>
    %133 = math.tanh %132 : vector<8x32xf32>
    %134 = vector.extract_strided_slice %131 {offsets = [0, 0], sizes = [8, 32], strides = [1, 1]} : vector<8x128xf32> to vector<8x32xf32>
    %135 = vector.extract_strided_slice %131 {offsets = [0, 32], sizes = [8, 32], strides = [1, 1]} : vector<8x128xf32> to vector<8x32xf32>
    %136 = vector.extract_strided_slice %131 {offsets = [0, 96], sizes = [8, 32], strides = [1, 1]} : vector<8x128xf32> to vector<8x32xf32>
    %137 = arith.mulf %135, %120 : vector<8x32xf32>
    %138 = arith.mulf %134, %133 : vector<8x32xf32>
    %139 = arith.addf %137, %138 : vector<8x32xf32>
    %140 = math.tanh %139 : vector<8x32xf32>
    %141 = arith.mulf %136, %140 : vector<8x32xf32>
    %142 = vector.extract_strided_slice %5 {offsets = [56, 0], sizes = [8, 128], strides = [1, 1]} : vector<64x128xf32> to vector<8x128xf32>
    %143 = arith.truncf %141 : vector<8x32xf32> to vector<8x32xbf16>
    %cst_23 = arith.constant dense<0.000000e+00> : vector<8x128xf32>
    %144 = tpu.matmul %143, %6, %cst_23 {dimension_numbers = #tpu.dot_dimension_numbers<[1], [0], [0], [1], [0, 0, 1, 1], [], []>} : vector<8x32xbf16>, vector<32x128xbf16>, vector<8x128xf32> -> vector<8x128xf32>
    %145 = arith.addf %142, %144 : vector<8x128xf32>
    %146 = arith.negf %145 : vector<8x128xf32>
    %147 = math.exp %146 : vector<8x128xf32>
    %cst_24 = arith.constant 1.000000e+00 : f32
    %148 = vector.broadcast %cst_24 : f32 to vector<8x128xf32>
    %149 = arith.addf %148, %147 : vector<8x128xf32>
    %150 = arith.divf %148, %149 : vector<8x128xf32>
    %151 = vector.extract_strided_slice %145 {offsets = [0, 64], sizes = [8, 32], strides = [1, 1]} : vector<8x128xf32> to vector<8x32xf32>
    %152 = math.tanh %151 : vector<8x32xf32>
    %153 = vector.extract_strided_slice %150 {offsets = [0, 0], sizes = [8, 32], strides = [1, 1]} : vector<8x128xf32> to vector<8x32xf32>
    %154 = vector.extract_strided_slice %150 {offsets = [0, 32], sizes = [8, 32], strides = [1, 1]} : vector<8x128xf32> to vector<8x32xf32>
    %155 = vector.extract_strided_slice %150 {offsets = [0, 96], sizes = [8, 32], strides = [1, 1]} : vector<8x128xf32> to vector<8x32xf32>
    %156 = arith.mulf %154, %139 : vector<8x32xf32>
    %157 = arith.mulf %153, %152 : vector<8x32xf32>
    %158 = arith.addf %156, %157 : vector<8x32xf32>
    %159 = math.tanh %158 : vector<8x32xf32>
    %160 = arith.mulf %155, %159 : vector<8x32xf32>
    %161 = tpu.concatenate %160, %158 in 1 : vector<8x32xf32>, vector<8x32xf32> -> vector<8x64xf32>
    %c0_25 = arith.constant 0 : index
    %c0_26 = arith.constant 0 : index
    %162 = vector.load %arg5[%c0_25, %c0_26] : memref<8x64xf32, #tpu.memory_space<vmem>>, vector<8x64xf32>
    tpu.vector_store %arg5[%c0_25, %c0_26], %161 {strides = array<i32>} : memref<8x64xf32, #tpu.memory_space<vmem>>, vector<8x64xf32>,
    return
  }
  func.func @transform_0(%arg0: i32) -> (i32, i32) {
    %c0_i32 = arith.constant 0 : i32
    %c0_i32_0 = arith.constant 0 : i32
    %c0_i32_1 = arith.constant 0 : i32
    return %c0_i32, %c0_i32_0 : i32, i32
  }
  func.func @transform_1(%arg0: i32) -> (i32, i32) {
    %c0_i32 = arith.constant 0 : i32
    %c0_i32_0 = arith.constant 0 : i32
    %c0_i32_1 = arith.constant 0 : i32
    return %c0_i32, %c0_i32_0 : i32, i32
  }
  func.func @transform_2(%arg0: i32) -> (i32, i32) {
    %c0_i32 = arith.constant 0 : i32
    %c0_i32_0 = arith.constant 0 : i32
    %c0_i32_1 = arith.constant 0 : i32
    return %c0_i32, %c0_i32_0 : i32, i32
  }
  func.func @transform_3(%arg0: i32) -> (i32, i32) {
    %c0_i32 = arith.constant 0 : i32
    %c0_i32_0 = arith.constant 0 : i32
    %c0_i32_1 = arith.constant 0 : i32
    return %c0_i32, %c0_i32_0 : i32, i32
  }
  func.func @transform_4(%arg0: i32) -> (i32, i32) {
    %c0_i32 = arith.constant 0 : i32
    %c0_i32_0 = arith.constant 0 : i32
    %c0_i32_1 = arith.constant 0 : i32
    return %c0_i32, %c0_i32_0 : i32, i32
  }
}

</mosaic_0001>

<llo_original>
// kernel: tpu_custom_call.1
$region0: #{tpu_custom_call.1}
  #allocation0 [shape = 'u32[]', space=smem, size = 0x4, offset = 0x4, fixed_abs, tag = 'smem constant byte address 0x4 - core index']
  #allocation1 [shape = 'u32[72,128]{1,0:T(1,128)}', space=vmem, size = 0x9000, scoped, tag = 'internal scratch']
  %s0 = inlined_call_operand.vmem [shape: bf16[64,32], index: 0, kind: input, shape index: {}]
  %s1 = inlined_call_operand.vmem [shape: bf16[32,128], index: 1, kind: input, shape index: {}]
  %s2 = inlined_call_operand.vmem [shape: bf16[32,128], index: 2, kind: input, shape index: {}]
  %s3 = inlined_call_operand.vmem [shape: f32[1,128], index: 3, kind: input, shape index: {}]
  %s4 = inlined_call_operand.hbm [shape: f32[8,64], index: 4, kind: output, shape index: {}]
  %s5 = sld [smem:[#allocation0]]
  $region26: #{tpu_custom_call.1} parent=0
    _
  %s7 = ssub.s32 1, %s5
  %s8 = scalar_select 0, %s7, %s5
  $region1: #{tpu_custom_call.1} parent=0
    #allocation2 [shape = 'u8[4096]{0}', space=vmem, size = 0x1000, scoped, tag = 'output window, operand 0, single buffered']
    #allocation3 [shape = 's32[1]{0}', space=sflag, size = 0x4, scoped, tag = 'scoped memory for tpu_custom_call.1']
    %9 = vsyncpa [#allocation3], 0
    // Predicated region
    $region2: #{tpu_custom_call.1} parent=1 // pred_check
      _
    $region3: #{tpu_custom_call.1} parent=1 // pred_check_branch
      %11 = sbr.rel (0) target = $region5
    $region4: #{tpu_custom_call.1} parent=1 // pred_region
      _
    $region5: #{tpu_custom_call.1} parent=1 // pred_fallthru
      _
    // Predicated region
    $region6: #{tpu_custom_call.1} parent=1 // pred_check
      _
    $region7: #{tpu_custom_call.1} parent=1 // pred_check_branch
      %13 = sbr.rel (0) target = $region9
    $region8: #{tpu_custom_call.1} parent=1 // pred_region
      _
    $region9: #{tpu_custom_call.1} parent=1 // pred_fallthru
      _
    // Predicated region
    $region10: #{tpu_custom_call.1} parent=1 // pred_check
      _
    $region11: #{tpu_custom_call.1} parent=1 // pred_check_branch
      %15 = sbr.rel (0) target = $region13
    $region12: #{tpu_custom_call.1} parent=1 // pred_region
      _
    $region13: #{tpu_custom_call.1} parent=1 // pred_fallthru
      _
    // Predicated region
    $region14: #{tpu_custom_call.1} parent=1 // pred_check
      _
    $region15: #{tpu_custom_call.1} parent=1 // pred_check_branch
      %17 = sbr.rel (0) target = $region17
    $region16: #{tpu_custom_call.1} parent=1 // pred_region
      _
    $region17: #{tpu_custom_call.1} parent=1 // pred_fallthru
      _
    %v19 = vld [vmem:[%s0] sm:$0xf]
    %v20 = vld [vmem:[%s0 + $0x4] sm:$0xf]
    %v21 = vld [vmem:[%s0 + $0x8] sm:$0xf]
    %v22 = vld [vmem:[%s0 + $0xc] sm:$0xf]
    %v23 = vld [vmem:[%s0 + $0x10] sm:$0xf]
    %v24 = vld [vmem:[%s0 + $0x14] sm:$0xf]
    %v25 = vld [vmem:[%s0 + $0x18] sm:$0xf]
    %v26 = vld [vmem:[%s0 + $0x1c] sm:$0xf]
    %v27 = vld [vmem:[%s1] sm:$0xf]
    %v28 = vld [vmem:[%s1 + $0x4] sm:$0xf]
    %v29 = vld [vmem:[%s1 + $0x8] sm:$0xf]
    %v30 = vld [vmem:[%s1 + $0xc] sm:$0xf]
    %v31 = vld [vmem:[%s3] sm:$0x1]
    %v33 = vperm.slane %v31, 0
    %v43 = vunpack.c.l.b16 %v19
    %v44 = vunpack.c.l.b16 %v20
    %v45 = vunpack.c.l.b16 %v21
    %v46 = vunpack.c.l.b16 %v22
    %v47 = vunpack.c.l.b16 %v23
    %v48 = vunpack.c.l.b16 %v24
    %v49 = vunpack.c.l.b16 %v25
    %v50 = vunpack.c.l.b16 %v26
    %v51 = vpack.c.b16 %v44, %v43
    %v52 = vpack.c.b16 %v46, %v45
    %v53 = vpack.c.b16 %v48, %v47
    %v54 = vpack.c.b16 %v50, %v49
    %v59 = vunpack.c.l.b16 %v27
    %v60 = vunpack.c.l.b16 %v28
    %v61 = vunpack.c.l.b16 %v29
    %v62 = vunpack.c.l.b16 %v30
    %v63 = vpack.c.b16 %v60, %v59
    %v64 = vpack.c.b16 %v62, %v61
    %vm67 = vcmask 261120
    %v69 = vsel %vm67, %v51, 0
    %v72 = vsel %vm67, %v52, 0
    %v75 = vsel %vm67, %v53, 0
    %v78 = vsel %vm67, %v54, 0
    %80 = vmatpush.bf16.msra.mxu0 0
    %81 = vmatpush.bf16.msra.mxu0 0
    %82 = vmatpush.bf16.msra.mxu0 0
    %83 = vmatpush.bf16.msra.mxu0 0
    %84 = vmatpush.bf16.msra.mxu0 0
    %85 = vmatpush.bf16.msra.mxu0 0
    %86 = vmatpush.bf16.msra.mxu0 %v64
    %87 = vmatpush.bf16.msra.mxu0 %v63
    %88 = vmatmul.bf16.gmra.mxu0 %v69
    %v89 = vpop.f32.mrf.mxu0
    %v90 = vadd.f32 %v33, %v89
    %v91 = vpop.f32.mrf.mxu0
    %v92 = vadd.f32 %v33, %v91
    %93 = vmatmul.bf16.gmra.mxu0 %v72
    %v94 = vpop.f32.mrf.mxu0
    %v95 = vadd.f32 %v33, %v94
    %v96 = vpop.f32.mrf.mxu0
    %v97 = vadd.f32 %v33, %v96
    %98 = vmatmul.bf16.gmra.mxu0 %v75
    %v99 = vpop.f32.mrf.mxu0
    %v100 = vadd.f32 %v33, %v99
    %v101 = vpop.f32.mrf.mxu0
    %v102 = vadd.f32 %v33, %v101
    %103 = vmatmul.bf16.gmra.mxu0 %v78
    %v104 = vpop.f32.mrf.mxu0
    %v105 = vadd.f32 %v33, %v104
    %v106 = vpop.f32.mrf.mxu0
    %v107 = vadd.f32 %v33, %v106
    %108 = vdwg.mxu0
    %v109 = vld [vmem:[%s2] sm:$0xf]
    %v110 = vld [vmem:[%s2 + $0x4] sm:$0xf]
    %v111 = vld [vmem:[%s2 + $0x8] sm:$0xf]
    %v112 = vld [vmem:[%s2 + $0xc] sm:$0xf]
    %v117 = vunpack.c.l.b16 %v109
    %v118 = vunpack.c.l.b16 %v110
    %v119 = vunpack.c.l.b16 %v111
    %v120 = vunpack.c.l.b16 %v112
    %v121 = vpack.c.b16 %v118, %v117
    %v122 = vpack.c.b16 %v120, %v119
    %v126 = vsel %vm67, 0, 0
    %128 = vmatpush.bf16.msra.mxu0 0
    %129 = vmatpush.bf16.msra.mxu0 0
    %130 = vmatpush.bf16.msra.mxu0 0
    %131 = vmatpush.bf16.msra.mxu0 0
    %132 = vmatpush.bf16.msra.mxu0 0
    %133 = vmatpush.bf16.msra.mxu0 0
    %134 = vmatpush.bf16.msra.mxu0 %v122
    %135 = vmatpush.bf16.msra.mxu0 %v121
    %136 = vmatmul.bf16.gmra.mxu0 %v126
    %v137 = vpop.f32.mrf.mxu0
    %v138 = vadd.f32 0.0, %v137
    %v139 = vpop.f32.mrf.mxu0
    %140 = vdwg.mxu0
    %v141 = vadd.f32 %v90, %v138
    %v142 = vxor.u32 %v141, 2147483648
    %v143 = vmul.f32 %v142, 1.442695
    %v144 = vpow.pop %v143
    %v145 = vadd.f32 %v144, 1.0
    %v146 = vrcp.pop %v145
    %v147 = vmul.f32 %v145, %v146
    %v148 = vsub.f32 1.0, %v147
    %v149 = vmul.f32 %v146, %v148
    %v150 = vadd.f32 %v146, %v149
    %vm151 = vweird.f32 %v145
    %vm152 = vweird.f32 %v146
    %vm153 = vmor %vm151, %vm152
    %v154 = vsel %vm153, %v146, %v150
    %v155 = vand.u32 2147483647, %v145
    %vm156 = vcmp.eq.f32.partialorder %v155, 8.507059e+37
    %v157 = vand.u32 %v145, 2147483648
    %v158 = vor.u32 1.1754944e-38, %v157
    %v159 = vsel %vm156, %v158, %v154
    %v160 = vmul.f32 1.0, %v159
    %v161 = vtanh.pop %v141
    %v162 = vmul.f32 %v160, 0.0
    %164 = vrot.lane.b32.xlu0 %v161, 64
    %v165 = vpop.permute.xlu0 %164
    %v167 = vmul.f32 %v160, %v165
    %169 = vrot.lane.b32.xlu0 %v167, 32
    %v170 = vpop.permute.xlu0 %169
    %v172 = vadd.f32 %v162, %v170
    %v173 = vtanh.pop %v172
    %175 = vrot.lane.b32.xlu0 %v173, 64
    %v176 = vpop.permute.xlu0 %175
    %v178 = vmul.f32 %v160, %v176
    %v179 = vpack.c.bf16 %v178, %v178
    %181 = vrot.lane.b32.xlu0 %v179, 32
    %v182 = vpop.permute.xlu0 %181
    %v184 = vsel %vm67, %v182, 0
    %186 = vmatpush.bf16.msra.mxu0 0
    %187 = vmatpush.bf16.msra.mxu0 0
    %188 = vmatpush.bf16.msra.mxu0 0
    %189 = vmatpush.bf16.msra.mxu0 0
    %190 = vmatpush.bf16.msra.mxu0 0
    %191 = vmatpush.bf16.msra.mxu0 0
    %192 = vmatpush.bf16.msra.mxu0 %v122
    %193 = vmatpush.bf16.msra.mxu0 %v121
    %194 = vmatmul.bf16.gmra.mxu0 %v184
    %v195 = vpop.f32.mrf.mxu0
    %v196 = vadd.f32 0.0, %v195
    %v197 = vpop.f32.mrf.mxu0
    %198 = vdwg.mxu0
    %v199 = vadd.f32 %v92, %v196
    %v200 = vxor.u32 %v199, 2147483648
    %v201 = vmul.f32 %v200, 1.442695
    %v202 = vpow.pop %v201
    %v203 = vadd.f32 %v202, 1.0
    %v204 = vrcp.pop %v203
    %v205 = vmul.f32 %v203, %v204
    %v206 = vsub.f32 1.0, %v205
    %v207 = vmul.f32 %v204, %v206
    %v208 = vadd.f32 %v204, %v207
    %vm209 = vweird.f32 %v203
    %vm210 = vweird.f32 %v204
    %vm211 = vmor %vm209, %vm210
    %v212 = vsel %vm211, %v204, %v208
    %v213 = vand.u32 2147483647, %v203
    %vm214 = vcmp.eq.f32.partialorder %v213, 8.507059e+37
    %v215 = vand.u32 %v203, 2147483648
    %v216 = vor.u32 1.1754944e-38, %v215
    %v217 = vsel %vm214, %v216, %v212
    %v218 = vmul.f32 1.0, %v217
    %v219 = vtanh.pop %v199
    %v220 = vmul.f32 %v218, %v172
    %222 = vrot.lane.b32.xlu0 %v219, 64
    %v223 = vpop.permute.xlu0 %222
    %v225 = vmul.f32 %v218, %v223
    %227 = vrot.lane.b32.xlu0 %v225, 32
    %v228 = vpop.permute.xlu0 %227
    %v230 = vadd.f32 %v220, %v228
    %v231 = vtanh.pop %v230
    %233 = vrot.lane.b32.xlu0 %v231, 64
    %v234 = vpop.permute.xlu0 %233
    %v236 = vmul.f32 %v218, %v234
    %v237 = vpack.c.bf16 %v236, %v236
    %239 = vrot.lane.b32.xlu0 %v237, 32
    %v240 = vpop.permute.xlu0 %239
    %v242 = vsel %vm67, %v240, 0
    %244 = vmatpush.bf16.msra.mxu0 0
    %245 = vmatpush.bf16.msra.mxu0 0
    %246 = vmatpush.bf16.msra.mxu0 0
    %247 = vmatpush.bf16.msra.mxu0 0
    %248 = vmatpush.bf16.msra.mxu0 0
    %249 = vmatpush.bf16.msra.mxu0 0
    %250 = vmatpush.bf16.msra.mxu0 %v122
    %251 = vmatpush.bf16.msra.mxu0 %v121
    %252 = vmatmul.bf16.gmra.mxu0 %v242
    %v253 = vpop.f32.mrf.mxu0
    %v254 = vadd.f32 0.0, %v253
    %v255 = vpop.f32.mrf.mxu0
    %256 = vdwg.mxu0
    %v257 = vadd.f32 %v95, %v254
    %v258 = vxor.u32 %v257, 2147483648
    %v259 = vmul.f32 %v258, 1.442695
    %v260 = vpow.pop %v259
    %v261 = vadd.f32 %v260, 1.0
    %v262 = vrcp.pop %v261
    %v263 = vmul.f32 %v261, %v262
    %v264 = vsub.f32 1.0, %v263
    %v265 = vmul.f32 %v262, %v264
    %v266 = vadd.f32 %v262, %v265
    %vm267 = vweird.f32 %v261
    %vm268 = vweird.f32 %v262
    %vm269 = vmor %vm267, %vm268
    %v270 = vsel %vm269, %v262, %v266
    %v271 = vand.u32 2147483647, %v261
    %vm272 = vcmp.eq.f32.partialorder %v271, 8.507059e+37
    %v273 = vand.u32 %v261, 2147483648
    %v274 = vor.u32 1.1754944e-38, %v273
    %v275 = vsel %vm272, %v274, %v270
    %v276 = vmul.f32 1.0, %v275
    %v277 = vtanh.pop %v257
    %v278 = vmul.f32 %v276, %v230
    %280 = vrot.lane.b32.xlu0 %v277, 64
    %v281 = vpop.permute.xlu0 %280
    %v283 = vmul.f32 %v276, %v281
    %285 = vrot.lane.b32.xlu0 %v283, 32
    %v286 = vpop.permute.xlu0 %285
    %v288 = vadd.f32 %v278, %v286
    %v289 = vtanh.pop %v288
    %291 = vrot.lane.b32.xlu0 %v289, 64
    %v292 = vpop.permute.xlu0 %291
    %v294 = vmul.f32 %v276, %v292
    %v295 = vpack.c.bf16 %v294, %v294
    %297 = vrot.lane.b32.xlu0 %v295, 32
    %v298 = vpop.permute.xlu0 %297
    %v300 = vsel %vm67, %v298, 0
    %302 = vmatpush.bf16.msra.mxu0 0
    %303 = vmatpush.bf16.msra.mxu0 0
    %304 = vmatpush.bf16.msra.mxu0 0
    %305 = vmatpush.bf16.msra.mxu0 0
    %306 = vmatpush.bf16.msra.mxu0 0
    %307 = vmatpush.bf16.msra.mxu0 0
    %308 = vmatpush.bf16.msra.mxu0 %v122
    %309 = vmatpush.bf16.msra.mxu0 %v121
    %310 = vmatmul.bf16.gmra.mxu0 %v300
    %v311 = vpop.f32.mrf.mxu0
    %v312 = vadd.f32 0.0, %v311
    %v313 = vpop.f32.mrf.mxu0
    %314 = vdwg.mxu0
    %v315 = vadd.f32 %v97, %v312
    %v316 = vxor.u32 %v315, 2147483648
    %v317 = vmul.f32 %v316, 1.442695
    %v318 = vpow.pop %v317
    %v319 = vadd.f32 %v318, 1.0
    %v320 = vrcp.pop %v319
    %v321 = vmul.f32 %v319, %v320
    %v322 = vsub.f32 1.0, %v321
    %v323 = vmul.f32 %v320, %v322
    %v324 = vadd.f32 %v320, %v323
    %vm325 = vweird.f32 %v319
    %vm326 = vweird.f32 %v320
    %vm327 = vmor %vm325, %vm326
    %v328 = vsel %vm327, %v320, %v324
    %v329 = vand.u32 2147483647, %v319
    %vm330 = vcmp.eq.f32.partialorder %v329, 8.507059e+37
    %v331 = vand.u32 %v319, 2147483648
    %v332 = vor.u32 1.1754944e-38, %v331
    %v333 = vsel %vm330, %v332, %v328
    %v334 = vmul.f32 1.0, %v333
    %v335 = vtanh.pop %v315
    %v336 = vmul.f32 %v334, %v288
    %338 = vrot.lane.b32.xlu0 %v335, 64
    %v339 = vpop.permute.xlu0 %338
    %v341 = vmul.f32 %v334, %v339
    %343 = vrot.lane.b32.xlu0 %v341, 32
    %v344 = vpop.permute.xlu0 %343
    %v346 = vadd.f32 %v336, %v344
    %v347 = vtanh.pop %v346
    %349 = vrot.lane.b32.xlu0 %v347, 64
    %v350 = vpop.permute.xlu0 %349
    %v352 = vmul.f32 %v334, %v350
    %v353 = vpack.c.bf16 %v352, %v352
    %355 = vrot.lane.b32.xlu0 %v353, 32
    %v356 = vpop.permute.xlu0 %355
    %v358 = vsel %vm67, %v356, 0
    %360 = vmatpush.bf16.msra.mxu0 0
    %361 = vmatpush.bf16.msra.mxu0 0
    %362 = vmatpush.bf16.msra.mxu0 0
    %363 = vmatpush.bf16.msra.mxu0 0
    %364 = vmatpush.bf16.msra.mxu0 0
    %365 = vmatpush.bf16.msra.mxu0 0
    %366 = vmatpush.bf16.msra.mxu0 %v122
    %367 = vmatpush.bf16.msra.mxu0 %v121
    %368 = vmatmul.bf16.gmra.mxu0 %v358
    %v369 = vpop.f32.mrf.mxu0
    %v370 = vadd.f32 0.0, %v369
    %v371 = vpop.f32.mrf.mxu0
    %372 = vdwg.mxu0
    %v373 = vadd.f32 %v100, %v370
    %v374 = vxor.u32 %v373, 2147483648
    %v375 = vmul.f32 %v374, 1.442695
    %v376 = vpow.pop %v375
    %v377 = vadd.f32 %v376, 1.0
    %v378 = vrcp.pop %v377
    %v379 = vmul.f32 %v377, %v378
    %v380 = vsub.f32 1.0, %v379
    %v381 = vmul.f32 %v378, %v380
    %v382 = vadd.f32 %v378, %v381
    %vm383 = vweird.f32 %v377
    %vm384 = vweird.f32 %v378
    %vm385 = vmor %vm383, %vm384
    %v386 = vsel %vm385, %v378, %v382
    %v387 = vand.u32 2147483647, %v377
    %vm388 = vcmp.eq.f32.partialorder %v387, 8.507059e+37
    %v389 = vand.u32 %v377, 2147483648
    %v390 = vor.u32 1.1754944e-38, %v389
    %v391 = vsel %vm388, %v390, %v386
    %v392 = vmul.f32 1.0, %v391
    %v393 = vtanh.pop %v373
    %v394 = vmul.f32 %v392, %v346
    %396 = vrot.lane.b32.xlu0 %v393, 64
    %v397 = vpop.permute.xlu0 %396
    %v399 = vmul.f32 %v392, %v397
    %401 = vrot.lane.b32.xlu0 %v399, 32
    %v402 = vpop.permute.xlu0 %401
    %v404 = vadd.f32 %v394, %v402
    %v405 = vtanh.pop %v404
    %407 = vrot.lane.b32.xlu0 %v405, 64
    %v408 = vpop.permute.xlu0 %407
    %v410 = vmul.f32 %v392, %v408
    %v411 = vpack.c.bf16 %v410, %v410
    %413 = vrot.lane.b32.xlu0 %v411, 32
    %v414 = vpop.permute.xlu0 %413
    %v416 = vsel %vm67, %v414, 0
    %418 = vmatpush.bf16.msra.mxu0 0
    %419 = vmatpush.bf16.msra.mxu0 0
    %420 = vmatpush.bf16.msra.mxu0 0
    %421 = vmatpush.bf16.msra.mxu0 0
    %422 = vmatpush.bf16.msra.mxu0 0
    %423 = vmatpush.bf16.msra.mxu0 0
    %424 = vmatpush.bf16.msra.mxu0 %v122
    %425 = vmatpush.bf16.msra.mxu0 %v121
    %426 = vmatmul.bf16.gmra.mxu0 %v416
    %v427 = vpop.f32.mrf.mxu0
    %v428 = vadd.f32 0.0, %v427
    %v429 = vpop.f32.mrf.mxu0
    %430 = vdwg.mxu0
    %v431 = vadd.f32 %v102, %v428
    %v432 = vxor.u32 %v431, 2147483648
    %v433 = vmul.f32 %v432, 1.442695
    %v434 = vpow.pop %v433
    %v435 = vadd.f32 %v434, 1.0
    %v436 = vrcp.pop %v435
    %v437 = vmul.f32 %v435, %v436
    %v438 = vsub.f32 1.0, %v437
    %v439 = vmul.f32 %v436, %v438
    %v440 = vadd.f32 %v436, %v439
    %vm441 = vweird.f32 %v435
    %vm442 = vweird.f32 %v436
    %vm443 = vmor %vm441, %vm442
    %v444 = vsel %vm443, %v436, %v440
    %v445 = vand.u32 2147483647, %v435
    %vm446 = vcmp.eq.f32.partialorder %v445, 8.507059e+37
    %v447 = vand.u32 %v435, 2147483648
    %v448 = vor.u32 1.1754944e-38, %v447
    %v449 = vsel %vm446, %v448, %v444
    %v450 = vmul.f32 1.0, %v449
    %v451 = vtanh.pop %v431
    %v452 = vmul.f32 %v450, %v404
    %454 = vrot.lane.b32.xlu0 %v451, 64
    %v455 = vpop.permute.xlu0 %454
    %v457 = vmul.f32 %v450, %v455
    %459 = vrot.lane.b32.xlu0 %v457, 32
    %v460 = vpop.permute.xlu0 %459
    %v462 = vadd.f32 %v452, %v460
    %v463 = vtanh.pop %v462
    %465 = vrot.lane.b32.xlu0 %v463, 64
    %v466 = vpop.permute.xlu0 %465
    %v468 = vmul.f32 %v450, %v466
    %v469 = vpack.c.bf16 %v468, %v468
    %471 = vrot.lane.b32.xlu0 %v469, 32
    %v472 = vpop.permute.xlu0 %471
    %v474 = vsel %vm67, %v472, 0
    %476 = vmatpush.bf16.msra.mxu0 0
    %477 = vmatpush.bf16.msra.mxu0 0
    %478 = vmatpush.bf16.msra.mxu0 0
    %479 = vmatpush.bf16.msra.mxu0 0
    %480 = vmatpush.bf16.msra.mxu0 0
    %481 = vmatpush.bf16.msra.mxu0 0
    %482 = vmatpush.bf16.msra.mxu0 %v122
    %483 = vmatpush.bf16.msra.mxu0 %v121
    %484 = vmatmul.bf16.gmra.mxu0 %v474
    %v485 = vpop.f32.mrf.mxu0
    %v486 = vadd.f32 0.0, %v485
    %v487 = vpop.f32.mrf.mxu0
    %488 = vdwg.mxu0
    %v489 = vadd.f32 %v105, %v486
    %v490 = vxor.u32 %v489, 2147483648
    %v491 = vmul.f32 %v490, 1.442695
    %v492 = vpow.pop %v491
    %v493 = vadd.f32 %v492, 1.0
    %v494 = vrcp.pop %v493
    %v495 = vmul.f32 %v493, %v494
    %v496 = vsub.f32 1.0, %v495
    %v497 = vmul.f32 %v494, %v496
    %v498 = vadd.f32 %v494, %v497
    %vm499 = vweird.f32 %v493
    %vm500 = vweird.f32 %v494
    %vm501 = vmor %vm499, %vm500
    %v502 = vsel %vm501, %v494, %v498
    %v503 = vand.u32 2147483647, %v493
    %vm504 = vcmp.eq.f32.partialorder %v503, 8.507059e+37
    %v505 = vand.u32 %v493, 2147483648
    %v506 = vor.u32 1.1754944e-38, %v505
    %v507 = vsel %vm504, %v506, %v502
    %v508 = vmul.f32 1.0, %v507
    %v509 = vtanh.pop %v489
    %v510 = vmul.f32 %v508, %v462
    %512 = vrot.lane.b32.xlu0 %v509, 64
    %v513 = vpop.permute.xlu0 %512
    %v515 = vmul.f32 %v508, %v513
    %517 = vrot.lane.b32.xlu0 %v515, 32
    %v518 = vpop.permute.xlu0 %517
    %v520 = vadd.f32 %v510, %v518
    %v521 = vtanh.pop %v520
    %523 = vrot.lane.b32.xlu0 %v521, 64
    %v524 = vpop.permute.xlu0 %523
    %v526 = vmul.f32 %v508, %v524
    %v527 = vpack.c.bf16 %v526, %v526
    %529 = vrot.lane.b32.xlu0 %v527, 32
    %v530 = vpop.permute.xlu0 %529
    %v532 = vsel %vm67, %v530, 0
    %534 = vmatpush.bf16.msra.mxu0 0
    %535 = vmatpush.bf16.msra.mxu0 0
    %536 = vmatpush.bf16.msra.mxu0 0
    %537 = vmatpush.bf16.msra.mxu0 0
    %538 = vmatpush.bf16.msra.mxu0 0
    %539 = vmatpush.bf16.msra.mxu0 0
    %540 = vmatpush.bf16.msra.mxu0 %v122
    %541 = vmatpush.bf16.msra.mxu0 %v121
    %542 = vmatmul.bf16.gmra.mxu0 %v532
    %v543 = vpop.f32.mrf.mxu0
    %v544 = vadd.f32 0.0, %v543
    %v545 = vpop.f32.mrf.mxu0
    %546 = vdwg.mxu0
    %v547 = vadd.f32 %v107, %v544
    %v548 = vxor.u32 %v547, 2147483648
    %v549 = vmul.f32 %v548, 1.442695
    %v550 = vpow.pop %v549
    %v551 = vadd.f32 %v550, 1.0
    %v552 = vrcp.pop %v551
    %v553 = vmul.f32 %v551, %v552
    %v554 = vsub.f32 1.0, %v553
    %v555 = vmul.f32 %v552, %v554
    %v556 = vadd.f32 %v552, %v555
    %vm557 = vweird.f32 %v551
    %vm558 = vweird.f32 %v552
    %vm559 = vmor %vm557, %vm558
    %v560 = vsel %vm559, %v552, %v556
    %v561 = vand.u32 2147483647, %v551
    %vm562 = vcmp.eq.f32.partialorder %v561, 8.507059e+37
    %v563 = vand.u32 %v551, 2147483648
    %v564 = vor.u32 1.1754944e-38, %v563
    %v565 = vsel %vm562, %v564, %v560
    %v566 = vmul.f32 1.0, %v565
    %v567 = vtanh.pop %v547
    %v568 = vmul.f32 %v566, %v520
    %570 = vrot.lane.b32.xlu0 %v567, 64
    %v571 = vpop.permute.xlu0 %570
    %v573 = vmul.f32 %v566, %v571
    %575 = vrot.lane.b32.xlu0 %v573, 32
    %v576 = vpop.permute.xlu0 %575
    %v578 = vadd.f32 %v568, %v576
    %v579 = vtanh.pop %v578
    %581 = vrot.lane.b32.xlu0 %v579, 64
    %v582 = vpop.permute.xlu0 %581
    %v584 = vmul.f32 %v566, %v582
    %586 = vrot.lane.b32.xlu0 %v584, 32
    %v587 = vpop.permute.xlu0 %586
    %v589 = vsel %vm67, %v587, %v578
    %vm590 = vcmask 523264
    %591 = vst.msk [vmem:[#allocation2] sm:$0xff] %vm590, %v589
    // Predicated region
    $region18: #{tpu_custom_call.1} parent=1 // pred_check
      _
    $region19: #{tpu_custom_call.1} parent=1 // pred_check_branch
      %593 = sbr.rel (0) target = $region21
    $region20: #{tpu_custom_call.1} parent=1 // pred_region
      %595 = vsyncadd [#allocation3], 0
      %s597 = sshll.u32 [#allocation2], 4
      %s598 = int_to_ptr.vmem [resolvable:$true] %s597
      %s599 = sshll.u32 %s4, 4
      %s600 = int_to_ptr.hbm [resolvable:$true] %s599
      %602 = dma.vmem_to_hbm [thread:$0]  %s598, 128, %s600, [#allocation3]
    $region21: #{tpu_custom_call.1} parent=1 // pred_fallthru
      _
    // Predicated region
    $region22: #{tpu_custom_call.1} parent=1 // pred_check
      _
    $region23: #{tpu_custom_call.1} parent=1 // pred_check_branch
      %604 = sbr.rel (0) target = $region25
    $region24: #{tpu_custom_call.1} parent=1 // pred_region
      %606 = dma.done [#allocation3], 128
    $region25: #{tpu_custom_call.1} parent=1 // pred_fallthru
      _
    %607 = vsyncpa [#allocation3], 1

</llo_original>
